<compile_context>
chip_gen: v6e
topology: v6e:2x2x1
jax: 0.10.0
libtpu: 0.0.40
codegen_flags: <defaults>
</compile_context>

<pallas_src>
import functools

import jax
import jax.numpy as jnp
from jax.experimental import pallas as pl
from jax.experimental.pallas import tpu as pltpu


def _round_up(x, m):
    return (x + m - 1) // m * m


def _merge_kernel(xf_ref, g_ref, w1t_ref, w2t_ref, wfct_ref, bfc_ref,
                  lnw_ref, lnb_ref, o_ref, *, eps, oc):
    xf = xf_ref[...]                                                       # (TN, D) f32

    # AttentionPool.attention_weights: Linear -> ReLU -> Linear -> Sigmoid.
    # Dominant matmuls in bf16 on the MXU, accumulate in f32.
    xb = xf.astype(jnp.bfloat16)
    h = jnp.dot(xb, w1t_ref[...], preferred_element_type=jnp.float32)      # (TN, H)
    h = jnp.maximum(h, 0.0)
    y = jnp.dot(h.astype(jnp.bfloat16), w2t_ref[...],
                preferred_element_type=jnp.float32)                        # (TN, D)
    y = jax.nn.sigmoid(y)

    # softmax over each channel's ms slots + weighted sum, via matmuls with
    # the group-indicator matrix g (D, C).  exp() without max-subtraction is
    # safe: sigmoid outputs are bounded in (0, 1).
    e = jnp.exp(y)
    g = g_ref[...]
    denom = jnp.dot(e, g, preferred_element_type=jnp.float32)              # (TN, C)
    num = jnp.dot(xf * e, g, preferred_element_type=jnp.float32)           # (TN, C)
    x_attn = num * pl.reciprocal(denom, approx=True)        # divide on the EUP

    # fc (Linear with bias, lane-padded to OCp) + LayerNorm over the real
    # `oc` features.  Padded output columns are exactly 0 (zero weight/bias),
    # so sums over the padded slab equal sums over the real features.
    out = jnp.dot(x_attn, wfct_ref[...], preferred_element_type=jnp.float32)
    out = out + bfc_ref[...]
    inv_oc = 1.0 / oc
    mean = jnp.sum(out, axis=-1, keepdims=True) * inv_oc
    msq = jnp.sum(out * out, axis=-1, keepdims=True) * inv_oc
    var = msq - mean * mean
    out = (out - mean) * jax.lax.rsqrt(var + eps)
    out = out * lnw_ref[...] + lnb_ref[...]                  # padded cols -> 0
    o_ref[...] = out.astype(o_ref.dtype)


def _vmem_estimate(tile_n, D, H, C, OCp):
    """Rough bytes-in-VMEM estimate for one grid step (double-buffered I/O +
    resident weights + live f32 intermediates)."""
    weights = 2 * (2 * D * H * 2 + D * C * 4 + C * OCp * 4 + 3 * OCp * 4)
    tiles = 2 * (tile_n * D * 4 + tile_n * OCp * 4)
    interm = tile_n * (H + 3 * D + 2 * C + 2 * OCp) * 4
    return weights + tiles + interm


def merge_block_forward(x, params, merge_scale, *, tile_n=None, eps=1e-5):
    """x: (B, T, C) float32 -> (B, ceil(T/ms), C*expand)."""
    B, T, C = x.shape
    ms = T if merge_scale == -1 else int(merge_scale)
    pad = (-T) % ms
    if pad:
        x = jnp.pad(x, ((0, 0), (0, pad), (0, 0)))
        T += pad
    t = T // ms
    D = C * ms

    # Flat feature order j = m*C + c: pure reshape, no HBM transpose of x.
    xf = x.reshape(B * t, D)
    N = B * t

    w1, w2, wfc, bfc, lnw, lnb = (params[k] for k in
                                  ("w1", "w2", "wfc", "bfc", "lnw", "lnb"))
    H = w1.shape[0]
    OC = wfc.shape[0]
    OCp = _round_up(OC, 128)          # lane-dense output stores

    # Row tile: biggest of {512, 256, 128} whose footprint fits comfortably in
    # scoped VMEM (amortizes per-step overhead and fills the MXU), clamped to
    # the (16-aligned, for bf16 sublane packing) rows actually available.
    if tile_n is None:
        tile_n = 128
        for cand in (512, 256):
            if _vmem_estimate(cand, D, H, C, OCp) <= 48 * 2 ** 20:
                tile_n = cand
                break
    tile_n = max(16, min(tile_n, _round_up(N, 16)))
    Np = _round_up(N, tile_n)
    if Np != N:
        xf = jnp.pad(xf, ((0, Np - N), (0, 0)))

    # Fold PyTorch's transpose(-1,-2) into the weights: flat index j = m*C+c
    # corresponds to PyTorch feature index q[j] = c*ms + m.
    q = jnp.arange(D).reshape(C, ms).T.reshape(D)
    w1t = w1[:, q].T.astype(jnp.bfloat16)            # (D, H)
    w2t = w2[q, :].T.astype(jnp.bfloat16)            # (H, D)

    # Group indicator: column c selects flat features {m*C + c : m}.
    g = (jnp.arange(D)[:, None] % C == jnp.arange(C)[None, :]).astype(jnp.float32)

    pad_oc = OCp - OC
    wfct = jnp.pad(wfc.T, ((0, 0), (0, pad_oc))).astype(jnp.float32)   # (C, OCp)
    bfc_p = jnp.pad(bfc, (0, pad_oc)).reshape(1, OCp)
    lnw_p = jnp.pad(lnw, (0, pad_oc)).reshape(1, OCp)
    lnb_p = jnp.pad(lnb, (0, pad_oc)).reshape(1, OCp)

    est = _vmem_estimate(tile_n, D, H, C, OCp)
    vmem_limit = int(min(max(2 * est, 32 * 2 ** 20), 64 * 2 ** 20))

    def full(shape):
        return pl.BlockSpec(shape, lambda i: (0, 0))

    # TODO(synk): for very large D (= C*ms) the resident w1/w2 weights should
    # be K-tiled over a second ("arbitrary") grid axis and/or single-buffered
    # to fit v7x's 64 MiB VMEM; unnecessary at these sizes.
    out = pl.pallas_call(
        functools.partial(_merge_kernel, eps=eps, oc=OC),
        out_shape=jax.ShapeDtypeStruct((Np, OCp), x.dtype),
        grid=(Np // tile_n,),
        in_specs=[
            pl.BlockSpec((tile_n, D), lambda i: (i, 0)),   # xf row tile
            full((D, C)),                                  # group indicator
            full((D, H)),                                  # w1^T (bf16, permuted)
            full((H, D)),                                  # w2^T (bf16, permuted)
            full((C, OCp)),                                # wfc^T (lane-padded)
            full((1, OCp)),                                # fc bias
            full((1, OCp)),                                # LN weight
            full((1, OCp)),                                # LN bias
        ],
        out_specs=pl.BlockSpec((tile_n, OCp), lambda i: (i, 0)),
        compiler_params=pltpu.CompilerParams(
            dimension_semantics=("parallel",),
            vmem_limit_bytes=vmem_limit),
    )(xf, g, w1t, w2t, wfct, bfc_p, lnw_p, lnb_p)

    return out[:N, :OC].reshape(B, t, OC)


def reference_forward(x, params, merge_scale, eps=1e-5):
    """Pure-JAX mirror of the PyTorch MergeBlock forward (for checking)."""
    B, T, C = x.shape
    ms = T if merge_scale == -1 else int(merge_scale)
    pad = (-T) % ms
    if pad:
        x = jnp.pad(x, ((0, 0), (0, pad), (0, 0)))
        T += pad
    t = T // ms
    x4 = x.reshape(B, t, ms, C)
    xf = jnp.transpose(x4, (0, 1, 3, 2)).reshape(B, t, ms * C)
    y = jax.nn.sigmoid(jnp.maximum(xf @ params["w1"].T, 0.0) @ params["w2"].T)
    xr = xf.reshape(B, t, C, ms)
    yr = y.reshape(B, t, C, ms)
    p = jax.nn.softmax(yr, axis=-1)
    x_attn = jnp.sum(xr * p, axis=-1)
    out = x_attn @ params["wfc"].T + params["bfc"]
    mean = out.mean(-1, keepdims=True)
    var = jnp.square(out - mean).mean(-1, keepdims=True)
    return (out - mean) / jnp.sqrt(var + eps) * params["lnw"] + params["lnb"]


def init_params(key, in_channels, merge_scale, expand=2, reduction=2):
    """Deterministic synthetic parameters matching the module's shapes."""
    D = in_channels * merge_scale            # AttentionPool input_dim
    OC = in_channels * expand
    ks = jax.random.split(key, 6)
    scale = 0.1
    return {
        # attention_weights: Linear(D, D*reduction, bias=False), Linear(D*reduction, D, bias=False)
        "w1": scale * jax.random.normal(ks[0], (D * reduction, D), jnp.float32),
        "w2": scale * jax.random.normal(ks[1], (D, D * reduction), jnp.float32),
        # TODO(synk): attention_weights_by_dim / avg_pool are defined in __init__ but unused in forward; omitted.
        "wfc": scale * jax.random.normal(ks[2], (OC, in_channels), jnp.float32),
        "bfc": scale * jax.random.normal(ks[3], (OC,), jnp.float32),
        "lnw": 1.0 + scale * jax.random.normal(ks[4], (OC,), jnp.float32),
        "lnb": scale * jax.random.normal(ks[5], (OC,), jnp.float32),
    }


if __name__ == "__main__":
    B, T, C = 2, 16, 16          # batch, sequence, in_channels
    MS = 4                       # merge_scale
    EXPAND = 2

    key = jax.random.PRNGKey(0)
    kx, kp = jax.random.split(key)
    x = jax.random.normal(kx, (B, T, C), jnp.float32)
    params = init_params(kp, C, MS, expand=EXPAND)

    out = merge_block_forward(x, params, MS)
    out = jax.block_until_ready(out)

    ref = reference_forward(x, params, MS)
    assert out.shape == (B, T // MS, C * EXPAND), out.shape
    # bf16 MXU operands + approx reciprocal -> slightly looser tolerance.
    assert jnp.allclose(out, ref, atol=2e-2, rtol=2e-2), "mismatch vs reference"

    print("KERNEL_OK")
</pallas_src>

<mosaic_0001>
module attributes {stable_mosaic.version = 11 : i64} {
  func.func @_merge_kernel(%arg0: i32, %arg1: memref<16x64xf32, #tpu.memory_space<vmem>>, %arg2: memref<64x16xf32, #tpu.memory_space<vmem>>, %arg3: memref<64x128xbf16, #tpu.memory_space<vmem>>, %arg4: memref<128x64xbf16, #tpu.memory_space<vmem>>, %arg5: memref<16x128xf32, #tpu.memory_space<vmem>>, %arg6: memref<1x128xf32, #tpu.memory_space<vmem>>, %arg7: memref<1x128xf32, #tpu.memory_space<vmem>>, %arg8: memref<1x128xf32, #tpu.memory_space<vmem>>, %arg9: memref<16x128xf32, #tpu.memory_space<vmem>>) attributes {dimension_semantics = [#tpu.dimension_semantics<parallel>], iteration_bounds = array<i64: 1>, scalar_prefetch = 0 : i64, scratch_operands = 0 : i64, tpu.core_type = #tpu.core_type<tc>, window_params = [{transform_indices = @transform_0, window_bounds = array<i64: 16, 64>}, {pipeline_mode = #tpu.pipeline_mode<synchronous>, transform_indices = @transform_1, window_bounds = array<i64: 64, 16>}, {pipeline_mode = #tpu.pipeline_mode<synchronous>, transform_indices = @transform_2, window_bounds = array<i64: 64, 128>}, {pipeline_mode = #tpu.pipeline_mode<synchronous>, transform_indices = @transform_3, window_bounds = array<i64: 128, 64>}, {pipeline_mode = #tpu.pipeline_mode<synchronous>, transform_indices = @transform_4, window_bounds = array<i64: 16, 128>}, {pipeline_mode = #tpu.pipeline_mode<synchronous>, transform_indices = @transform_5, window_bounds = array<i64: 1, 128>}, {pipeline_mode = #tpu.pipeline_mode<synchronous>, transform_indices = @transform_6, window_bounds = array<i64: 1, 128>}, {pipeline_mode = #tpu.pipeline_mode<synchronous>, transform_indices = @transform_7, window_bounds = array<i64: 1, 128>}, {transform_indices = @transform_8, window_bounds = array<i64: 16, 128>}]} {
    %c0 = arith.constant 0 : index
    %c0_0 = arith.constant 0 : index
    %0 = vector.load %arg1[%c0, %c0_0] : memref<16x64xf32, #tpu.memory_space<vmem>>, vector<16x64xf32>
    %1 = arith.truncf %0 : vector<16x64xf32> to vector<16x64xbf16>
    %c0_1 = arith.constant 0 : index
    %c0_2 = arith.constant 0 : index
    %2 = vector.load %arg3[%c0_1, %c0_2] : memref<64x128xbf16, #tpu.memory_space<vmem>>, vector<64x128xbf16>
    %cst = arith.constant dense<0.000000e+00> : vector<16x128xf32>
    %3 = tpu.matmul %1, %2, %cst {dimension_numbers = #tpu.dot_dimension_numbers<[1], [0], [0], [1], [0, 0, 1, 1], [], []>} : vector<16x64xbf16>, vector<64x128xbf16>, vector<16x128xf32> -> vector<16x128xf32>
    %cst_3 = arith.constant 0.000000e+00 : f32
    %4 = vector.broadcast %cst_3 : f32 to vector<16x128xf32>
    %5 = arith.maximumf %3, %4 : vector<16x128xf32>
    %6 = arith.truncf %5 : vector<16x128xf32> to vector<16x128xbf16>
    %c0_4 = arith.constant 0 : index
    %c0_5 = arith.constant 0 : index
    %7 = vector.load %arg4[%c0_4, %c0_5] : memref<128x64xbf16, #tpu.memory_space<vmem>>, vector<128x64xbf16>
    %cst_6 = arith.constant dense<0.000000e+00> : vector<16x64xf32>
    %8 = tpu.matmul %6, %7, %cst_6 {dimension_numbers = #tpu.dot_dimension_numbers<[1], [0], [0], [1], [0, 0, 1, 1], [], []>} : vector<16x128xbf16>, vector<128x64xbf16>, vector<16x64xf32> -> vector<16x64xf32>
    %9 = arith.negf %8 : vector<16x64xf32>
    %10 = math.exp %9 : vector<16x64xf32>
    %cst_7 = arith.constant 1.000000e+00 : f32
    %11 = vector.broadcast %cst_7 : f32 to vector<16x64xf32>
    %12 = arith.addf %11, %10 : vector<16x64xf32>
    %13 = arith.divf %11, %12 : vector<16x64xf32>
    %14 = math.exp %13 : vector<16x64xf32>
    %c0_8 = arith.constant 0 : index
    %c0_9 = arith.constant 0 : index
    %15 = vector.load %arg2[%c0_8, %c0_9] : memref<64x16xf32, #tpu.memory_space<vmem>>, vector<64x16xf32>
    %cst_10 = arith.constant dense<0.000000e+00> : vector<16x16xf32>
    %16 = tpu.matmul %14, %15, %cst_10 {dimension_numbers = #tpu.dot_dimension_numbers<[1], [0], [0], [1], [0, 0, 1, 1], [], []>} : vector<16x64xf32>, vector<64x16xf32>, vector<16x16xf32> -> vector<16x16xf32>
    %17 = arith.mulf %0, %14 : vector<16x64xf32>
    %cst_11 = arith.constant dense<0.000000e+00> : vector<16x16xf32>
    %18 = tpu.matmul %17, %15, %cst_11 {dimension_numbers = #tpu.dot_dimension_numbers<[1], [0], [0], [1], [0, 0, 1, 1], [], []>} : vector<16x64xf32>, vector<64x16xf32>, vector<16x16xf32> -> vector<16x16xf32>
    %19 = tpu.reciprocal %16 {approx = true} : vector<16x16xf32> -> vector<16x16xf32>
    %20 = arith.mulf %18, %19 : vector<16x16xf32>
    %c0_12 = arith.constant 0 : index
    %c0_13 = arith.constant 0 : index
    %21 = vector.load %arg5[%c0_12, %c0_13] : memref<16x128xf32, #tpu.memory_space<vmem>>, vector<16x128xf32>
    %cst_14 = arith.constant dense<0.000000e+00> : vector<16x128xf32>
    %22 = tpu.matmul %20, %21, %cst_14 {dimension_numbers = #tpu.dot_dimension_numbers<[1], [0], [0], [1], [0, 0, 1, 1], [], []>} : vector<16x16xf32>, vector<16x128xf32>, vector<16x128xf32> -> vector<16x128xf32>
    %c0_15 = arith.constant 0 : index
    %c0_16 = arith.constant 0 : index
    %23 = vector.load %arg6[%c0_15, %c0_16] : memref<1x128xf32, #tpu.memory_space<vmem>>, vector<1x128xf32>
    %24 = vector.broadcast %23 : vector<1x128xf32> to vector<16x128xf32>
    %25 = arith.addf %22, %24 : vector<16x128xf32>
    %cst_17 = arith.constant dense<0.000000e+00> : vector<16xf32>
    %26 = vector.multi_reduction <add>, %25, %cst_17 [1] : vector<16x128xf32> to vector<16xf32>
    %27 = vector.shape_cast %26 : vector<16xf32> to vector<16x1xf32>
    %cst_18 = arith.constant 3.125000e-02 : f32
    %28 = vector.broadcast %cst_18 : f32 to vector<16x1xf32>
    %29 = arith.mulf %27, %28 : vector<16x1xf32>
    %30 = arith.mulf %25, %25 : vector<16x128xf32>
    %cst_19 = arith.constant dense<0.000000e+00> : vector<16xf32>
    %31 = vector.multi_reduction <add>, %30, %cst_19 [1] : vector<16x128xf32> to vector<16xf32>
    %32 = vector.shape_cast %31 : vector<16xf32> to vector<16x1xf32>
    %cst_20 = arith.constant 3.125000e-02 : f32
    %33 = vector.broadcast %cst_20 : f32 to vector<16x1xf32>
    %34 = arith.mulf %32, %33 : vector<16x1xf32>
    %35 = arith.mulf %29, %29 : vector<16x1xf32>
    %36 = arith.subf %34, %35 : vector<16x1xf32>
    %37 = vector.broadcast %29 : vector<16x1xf32> to vector<16x128xf32>
    %38 = arith.subf %25, %37 : vector<16x128xf32>
    %cst_21 = arith.constant 9.99999974E-6 : f32
    %39 = vector.broadcast %cst_21 : f32 to vector<16x1xf32>
    %40 = arith.addf %36, %39 : vector<16x1xf32>
    %41 = math.rsqrt %40 : vector<16x1xf32>
    %42 = vector.broadcast %41 : vector<16x1xf32> to vector<16x128xf32>
    %43 = arith.mulf %38, %42 : vector<16x128xf32>
    %c0_22 = arith.constant 0 : index
    %c0_23 = arith.constant 0 : index
    %44 = vector.load %arg7[%c0_22, %c0_23] : memref<1x128xf32, #tpu.memory_space<vmem>>, vector<1x128xf32>
    %45 = vector.broadcast %44 : vector<1x128xf32> to vector<16x128xf32>
    %46 = arith.mulf %43, %45 : vector<16x128xf32>
    %c0_24 = arith.constant 0 : index
    %c0_25 = arith.constant 0 : index
    %47 = vector.load %arg8[%c0_24, %c0_25] : memref<1x128xf32, #tpu.memory_space<vmem>>, vector<1x128xf32>
    %48 = vector.broadcast %47 : vector<1x128xf32> to vector<16x128xf32>
    %49 = arith.addf %46, %48 : vector<16x128xf32>
    %c0_26 = arith.constant 0 : index
    %c0_27 = arith.constant 0 : index
    %50 = vector.load %arg9[%c0_26, %c0_27] : memref<16x128xf32, #tpu.memory_space<vmem>>, vector<16x128xf32>
    tpu.vector_store %arg9[%c0_26, %c0_27], %49 {strides = array<i32>} : memref<16x128xf32, #tpu.memory_space<vmem>>, vector<16x128xf32>,
    return
  }
  func.func @transform_0(%arg0: i32) -> (i32, i32) {
    %c0_i32 = arith.constant 0 : i32
    %c0_i32_0 = arith.constant 0 : i32
    return %arg0, %c0_i32 : i32, i32
  }
  func.func @transform_1(%arg0: i32) -> (i32, i32) {
    %c0_i32 = arith.constant 0 : i32
    %c0_i32_0 = arith.constant 0 : i32
    %c0_i32_1 = arith.constant 0 : i32
    return %c0_i32, %c0_i32_0 : i32, i32
  }
  func.func @transform_2(%arg0: i32) -> (i32, i32) {
    %c0_i32 = arith.constant 0 : i32
    %c0_i32_0 = arith.constant 0 : i32
    %c0_i32_1 = arith.constant 0 : i32
    return %c0_i32, %c0_i32_0 : i32, i32
  }
  func.func @transform_3(%arg0: i32) -> (i32, i32) {
    %c0_i32 = arith.constant 0 : i32
    %c0_i32_0 = arith.constant 0 : i32
    %c0_i32_1 = arith.constant 0 : i32
    return %c0_i32, %c0_i32_0 : i32, i32
  }
  func.func @transform_4(%arg0: i32) -> (i32, i32) {
    %c0_i32 = arith.constant 0 : i32
    %c0_i32_0 = arith.constant 0 : i32
    %c0_i32_1 = arith.constant 0 : i32
    return %c0_i32, %c0_i32_0 : i32, i32
  }
  func.func @transform_5(%arg0: i32) -> (i32, i32) {
    %c0_i32 = arith.constant 0 : i32
    %c0_i32_0 = arith.constant 0 : i32
    %c0_i32_1 = arith.constant 0 : i32
    return %c0_i32, %c0_i32_0 : i32, i32
  }
  func.func @transform_6(%arg0: i32) -> (i32, i32) {
    %c0_i32 = arith.constant 0 : i32
    %c0_i32_0 = arith.constant 0 : i32
    %c0_i32_1 = arith.constant 0 : i32
    return %c0_i32, %c0_i32_0 : i32, i32
  }
  func.func @transform_7(%arg0: i32) -> (i32, i32) {
    %c0_i32 = arith.constant 0 : i32
    %c0_i32_0 = arith.constant 0 : i32
    %c0_i32_1 = arith.constant 0 : i32
    return %c0_i32, %c0_i32_0 : i32, i32
  }
  func.func @transform_8(%arg0: i32) -> (i32, i32) {
    %c0_i32 = arith.constant 0 : i32
    %c0_i32_0 = arith.constant 0 : i32
    return %arg0, %c0_i32 : i32, i32
  }
}

</mosaic_0001>

<llo_original>
// kernel: tpu_custom_call.1
$region0: #{tpu_custom_call.1}
  #allocation0 [shape = 'u32[]', space=smem, size = 0x4, offset = 0x4, fixed_abs, tag = 'smem constant byte address 0x4 - core index']
  #allocation1 [shape = 'u32[144,128]{1,0:T(1,128)}', space=vmem, size = 0x12000, scoped, tag = 'internal scratch']
  %s0 = inlined_call_operand.vmem [shape: f32[16,64], index: 0, kind: input, shape index: {}]
  %s1 = inlined_call_operand.vmem [shape: f32[64,16], index: 1, kind: input, shape index: {}]
  %s2 = inlined_call_operand.vmem [shape: bf16[64,128], index: 2, kind: input, shape index: {}]
  %s3 = inlined_call_operand.vmem [shape: bf16[128,64], index: 3, kind: input, shape index: {}]
  %s4 = inlined_call_operand.vmem [shape: f32[16,128], index: 4, kind: input, shape index: {}]
  %s5 = inlined_call_operand.vmem [shape: f32[1,128], index: 5, kind: input, shape index: {}]
  %s6 = inlined_call_operand.vmem [shape: f32[1,128], index: 6, kind: input, shape index: {}]
  %s7 = inlined_call_operand.vmem [shape: f32[1,128], index: 7, kind: input, shape index: {}]
  %s8 = inlined_call_operand.hbm [shape: f32[16,128], index: 8, kind: output, shape index: {}]
  %s9 = sld [smem:[#allocation0]]
  $region42: #{tpu_custom_call.1} parent=0
    _
  %s11 = ssub.s32 1, %s9
  %s12 = scalar_select 0, %s11, %s9
  $region1: #{tpu_custom_call.1} parent=0
    #allocation2 [shape = 'u8[8192]{0}', space=vmem, size = 0x2000, scoped, tag = 'output window, operand 0, single buffered']
    #allocation3 [shape = 's32[1]{0}', space=sflag, size = 0x4, scoped, tag = 'scoped memory for tpu_custom_call.1']
    %13 = vsyncpa [#allocation3], 0
    // Predicated region
    $region2: #{tpu_custom_call.1} parent=1 // pred_check
      _
    $region3: #{tpu_custom_call.1} parent=1 // pred_check_branch
      %15 = sbr.rel (0) target = $region5
    $region4: #{tpu_custom_call.1} parent=1 // pred_region
      _
    $region5: #{tpu_custom_call.1} parent=1 // pred_fallthru
      _
    // Predicated region
    $region6: #{tpu_custom_call.1} parent=1 // pred_check
      _
    $region7: #{tpu_custom_call.1} parent=1 // pred_check_branch
      %17 = sbr.rel (0) target = $region9
    $region8: #{tpu_custom_call.1} parent=1 // pred_region
      _
    $region9: #{tpu_custom_call.1} parent=1 // pred_fallthru
      _
    // Predicated region
    $region10: #{tpu_custom_call.1} parent=1 // pred_check
      _
    $region11: #{tpu_custom_call.1} parent=1 // pred_check_branch
      %19 = sbr.rel (0) target = $region13
    $region12: #{tpu_custom_call.1} parent=1 // pred_region
      _
    $region13: #{tpu_custom_call.1} parent=1 // pred_fallthru
      _
    // Predicated region
    $region14: #{tpu_custom_call.1} parent=1 // pred_check
      _
    $region15: #{tpu_custom_call.1} parent=1 // pred_check_branch
      %21 = sbr.rel (0) target = $region17
    $region16: #{tpu_custom_call.1} parent=1 // pred_region
      _
    $region17: #{tpu_custom_call.1} parent=1 // pred_fallthru
      _
    // Predicated region
    $region18: #{tpu_custom_call.1} parent=1 // pred_check
      _
    $region19: #{tpu_custom_call.1} parent=1 // pred_check_branch
      %23 = sbr.rel (0) target = $region21
    $region20: #{tpu_custom_call.1} parent=1 // pred_region
      _
    $region21: #{tpu_custom_call.1} parent=1 // pred_fallthru
      _
    // Predicated region
    $region22: #{tpu_custom_call.1} parent=1 // pred_check
      _
    $region23: #{tpu_custom_call.1} parent=1 // pred_check_branch
      %25 = sbr.rel (0) target = $region25
    $region24: #{tpu_custom_call.1} parent=1 // pred_region
      _
    $region25: #{tpu_custom_call.1} parent=1 // pred_fallthru
      _
    // Predicated region
    $region26: #{tpu_custom_call.1} parent=1 // pred_check
      _
    $region27: #{tpu_custom_call.1} parent=1 // pred_check_branch
      %27 = sbr.rel (0) target = $region29
    $region28: #{tpu_custom_call.1} parent=1 // pred_region
      _
    $region29: #{tpu_custom_call.1} parent=1 // pred_fallthru
      _
    // Predicated region
    $region30: #{tpu_custom_call.1} parent=1 // pred_check
      _
    $region31: #{tpu_custom_call.1} parent=1 // pred_check_branch
      %29 = sbr.rel (0) target = $region33
    $region32: #{tpu_custom_call.1} parent=1 // pred_region
      _
    $region33: #{tpu_custom_call.1} parent=1 // pred_fallthru
      _
    %v31 = vld [vmem:[%s0] sm:$0xff]
    %v32 = vld [vmem:[%s0 + $0x8] sm:$0xff]
    %v33 = vpack.c.bf16 %v32, %v31
    %v34 = vld [vmem:[%s2] sm:$0xf]
    %v35 = vld [vmem:[%s2 + $0x4] sm:$0xf]
    %v36 = vld [vmem:[%s2 + $0x8] sm:$0xf]
    %v37 = vld [vmem:[%s2 + $0xc] sm:$0xf]
    %v38 = vld [vmem:[%s2 + $0x10] sm:$0xf]
    %v39 = vld [vmem:[%s2 + $0x14] sm:$0xf]
    %v40 = vld [vmem:[%s2 + $0x18] sm:$0xf]
    %v41 = vld [vmem:[%s2 + $0x1c] sm:$0xf]
    %v50 = vunpack.c.l.b16 %v34
    %v51 = vunpack.c.l.b16 %v35
    %v52 = vunpack.c.l.b16 %v36
    %v53 = vunpack.c.l.b16 %v37
    %v54 = vunpack.c.l.b16 %v38
    %v55 = vunpack.c.l.b16 %v39
    %v56 = vunpack.c.l.b16 %v40
    %v57 = vunpack.c.l.b16 %v41
    %v58 = vpack.c.b16 %v51, %v50
    %v59 = vpack.c.b16 %v53, %v52
    %v60 = vpack.c.b16 %v55, %v54
    %v61 = vpack.c.b16 %v57, %v56
    %vm66 = vcmask 523264
    %v68 = vsel %vm66, %v33, 0
    %70 = vmatprep.subr.bf16.mxu0 0
    %71 = vmatpush1.bf16.msra.mxu0 0
    %72 = vmatprep.subr.bf16.mxu0 0
    %73 = vmatpush1.bf16.msra.mxu0 0
    %74 = vmatprep.subr.bf16.mxu0 0
    %75 = vmatpush1.bf16.msra.mxu0 0
    %76 = vmatprep.subr.bf16.mxu0 0
    %77 = vmatpush1.bf16.msra.mxu0 0
    %78 = vmatprep.subr.bf16.mxu0 0
    %79 = vmatpush1.bf16.msra.mxu0 %v61
    %80 = vmatprep.subr.bf16.mxu0 0
    %81 = vmatpush1.bf16.msra.mxu0 %v60
    %82 = vmatprep.subr.bf16.mxu0 0
    %83 = vmatpush1.bf16.msra.mxu0 %v59
    %84 = vmatprep.subr.bf16.mxu0 0
    %85 = vmatpush1.bf16.msra.mxu0 %v58
    %86 = vmatprep.subr.bf16.mxu0 0
    %87 = vmatpush2.bf16.msra.mxu0 0
    %88 = vmatprep.subr.bf16.mxu0 0
    %89 = vmatpush2.bf16.msra.mxu0 0
    %90 = vmatprep.subr.bf16.mxu0 0
    %91 = vmatpush2.bf16.msra.mxu0 0
    %92 = vmatprep.subr.bf16.mxu0 0
    %93 = vmatpush2.bf16.msra.mxu0 0
    %94 = vmatprep.subr.bf16.mxu0 0
    %95 = vmatpush2.bf16.msra.mxu0 0
    %96 = vmatprep.subr.bf16.mxu0 0
    %97 = vmatpush2.bf16.msra.mxu0 0
    %98 = vmatprep.subr.bf16.mxu0 0
    %99 = vmatpush2.bf16.msra.mxu0 0
    %100 = vmatprep.subr.bf16.mxu0 0
    %101 = vmatpush2.bf16.msra.mxu0 0
    %102 = vmatprep.mubr.bf16.mxu0 0
    %103 = vmatmul.mubr.bf16.gmra.mxu0 %v68
    %v104 = vpop.f32.mrf.mxu0
    %v105 = vadd.f32 0.0, %v104
    %v106 = vpop.f32.mrf.mxu0
    %v107 = vpop.f32.mrf.mxu0
    %v108 = vadd.f32 0.0, %v107
    %v109 = vpop.f32.mrf.mxu0
    %110 = vdwg.mxu0
    %v111 = vmax.f32 %v105, 0.0
    %v112 = vmax.f32 %v108, 0.0
    %v113 = vpack.c.bf16 %v112, %v111
    %v114 = vld [vmem:[%s3] sm:$0xf]
    %v115 = vld [vmem:[%s3 + $0x4] sm:$0xf]
    %v116 = vld [vmem:[%s3 + $0x8] sm:$0xf]
    %v117 = vld [vmem:[%s3 + $0xc] sm:$0xf]
    %v118 = vld [vmem:[%s3 + $0x10] sm:$0xf]
    %v119 = vld [vmem:[%s3 + $0x14] sm:$0xf]
    %v120 = vld [vmem:[%s3 + $0x18] sm:$0xf]
    %v121 = vld [vmem:[%s3 + $0x1c] sm:$0xf]
    %v122 = vld [vmem:[%s3 + $0x20] sm:$0xf]
    %v123 = vld [vmem:[%s3 + $0x24] sm:$0xf]
    %v124 = vld [vmem:[%s3 + $0x28] sm:$0xf]
    %v125 = vld [vmem:[%s3 + $0x2c] sm:$0xf]
    %v126 = vld [vmem:[%s3 + $0x30] sm:$0xf]
    %v127 = vld [vmem:[%s3 + $0x34] sm:$0xf]
    %v128 = vld [vmem:[%s3 + $0x38] sm:$0xf]
    %v129 = vld [vmem:[%s3 + $0x3c] sm:$0xf]
    %v146 = vunpack.c.l.b16 %v114
    %v147 = vunpack.c.l.b16 %v115
    %v148 = vunpack.c.l.b16 %v116
    %v149 = vunpack.c.l.b16 %v117
    %v150 = vunpack.c.l.b16 %v118
    %v151 = vunpack.c.l.b16 %v119
    %v152 = vunpack.c.l.b16 %v120
    %v153 = vunpack.c.l.b16 %v121
    %v154 = vunpack.c.l.b16 %v122
    %v155 = vunpack.c.l.b16 %v123
    %v156 = vunpack.c.l.b16 %v124
    %v157 = vunpack.c.l.b16 %v125
    %v158 = vunpack.c.l.b16 %v126
    %v159 = vunpack.c.l.b16 %v127
    %v160 = vunpack.c.l.b16 %v128
    %v161 = vunpack.c.l.b16 %v129
    %v162 = vpack.c.b16 %v147, %v146
    %v163 = vpack.c.b16 %v149, %v148
    %v164 = vpack.c.b16 %v151, %v150
    %v165 = vpack.c.b16 %v153, %v152
    %v166 = vpack.c.b16 %v155, %v154
    %v167 = vpack.c.b16 %v157, %v156
    %v168 = vpack.c.b16 %v159, %v158
    %v169 = vpack.c.b16 %v161, %v160
    %178 = vmatprep.subr.bf16.mxu0 0
    %179 = vmatpush1.bf16.msra.mxu0 %v169
    %180 = vmatprep.subr.bf16.mxu0 0
    %181 = vmatpush1.bf16.msra.mxu0 %v168
    %182 = vmatprep.subr.bf16.mxu0 0
    %183 = vmatpush1.bf16.msra.mxu0 %v167
    %184 = vmatprep.subr.bf16.mxu0 0
    %185 = vmatpush1.bf16.msra.mxu0 %v166
    %186 = vmatprep.subr.bf16.mxu0 0
    %187 = vmatpush1.bf16.msra.mxu0 %v165
    %188 = vmatprep.subr.bf16.mxu0 0
    %189 = vmatpush1.bf16.msra.mxu0 %v164
    %190 = vmatprep.subr.bf16.mxu0 0
    %191 = vmatpush1.bf16.msra.mxu0 %v163
    %192 = vmatprep.subr.bf16.mxu0 0
    %193 = vmatpush1.bf16.msra.mxu0 %v162
    %194 = vmatprep.subr.bf16.mxu0 0
    %195 = vmatpush2.bf16.msra.mxu0 0
    %196 = vmatprep.subr.bf16.mxu0 0
    %197 = vmatpush2.bf16.msra.mxu0 0
    %198 = vmatprep.subr.bf16.mxu0 0
    %199 = vmatpush2.bf16.msra.mxu0 0
    %200 = vmatprep.subr.bf16.mxu0 0
    %201 = vmatpush2.bf16.msra.mxu0 0
    %202 = vmatprep.subr.bf16.mxu0 0
    %203 = vmatpush2.bf16.msra.mxu0 0
    %204 = vmatprep.subr.bf16.mxu0 0
    %205 = vmatpush2.bf16.msra.mxu0 0
    %206 = vmatprep.subr.bf16.mxu0 0
    %207 = vmatpush2.bf16.msra.mxu0 0
    %208 = vmatprep.subr.bf16.mxu0 0
    %209 = vmatpush2.bf16.msra.mxu0 0
    %210 = vmatprep.mubr.bf16.mxu0 0
    %211 = vmatmul.mubr.bf16.gmra.mxu0 %v113
    %v212 = vpop.f32.mrf.mxu0
    %v213 = vadd.f32 0.0, %v212
    %v214 = vpop.f32.mrf.mxu0
    %v215 = vpop.f32.mrf.mxu0
    %v216 = vadd.f32 0.0, %v215
    %v217 = vpop.f32.mrf.mxu0
    %218 = vdwg.mxu0
    %v219 = vxor.u32 %v213, 2147483648
    %v220 = vxor.u32 %v216, 2147483648
    %v221 = vmul.f32 %v219, 1.442695
    %v222 = vpow.pop %v221
    %v223 = vmul.f32 %v220, 1.442695
    %v224 = vpow.pop %v223
    %v225 = vadd.f32 %v222, 1.0
    %v226 = vadd.f32 %v224, 1.0
    %v227 = vrcp.pop %v225
    %v228 = vmul.f32 1.0, %v227
    %v229 = vrcp.pop %v226
    %v230 = vmul.f32 1.0, %v229
    %v231 = vmul.f32 %v228, 1.442695
    %v232 = vpow.pop %v231
    %v233 = vmul.f32 %v230, 1.442695
    %v234 = vpow.pop %v233
    %v235 = vld [vmem:[%s1] sm:$0xff]
    %v236 = vld [vmem:[%s1 + $0x8] sm:$0xff]
    %v237 = vld [vmem:[%s1 + $0x10] sm:$0xff]
    %v238 = vld [vmem:[%s1 + $0x18] sm:$0xff]
    %v239 = vld [vmem:[%s1 + $0x20] sm:$0xff]
    %v240 = vld [vmem:[%s1 + $0x28] sm:$0xff]
    %v241 = vld [vmem:[%s1 + $0x30] sm:$0xff]
    %v242 = vld [vmem:[%s1 + $0x38] sm:$0xff]
    %v244 = vsel %vm66, %v232, 0
    %v247 = vsel %vm66, %v234, 0
    %249 = vmatprep.subr.mxu0 0.0
    %250 = vmatpush1.msra.mxu0 0.0
    %251 = vmatprep.subr.mxu0 0.0
    %252 = vmatpush1.msra.mxu0 0.0
    %253 = vmatprep.subr.mxu0 0.0
    %254 = vmatpush1.msra.mxu0 0.0
    %255 = vmatprep.subr.mxu0 0.0
    %256 = vmatpush1.msra.mxu0 0.0
    %257 = vmatprep.subr.mxu0 0.0
    %258 = vmatpush1.msra.mxu0 0.0
    %259 = vmatprep.subr.mxu0 0.0
    %260 = vmatpush1.msra.mxu0 0.0
    %261 = vmatprep.subr.mxu0 0.0
    %262 = vmatpush1.msra.mxu0 0.0
    %263 = vmatprep.subr.mxu0 0.0
    %264 = vmatpush1.msra.mxu0 0.0
    %265 = vmatprep.subr.mxu0 0.0
    %266 = vmatpush1.msra.mxu0 %v242
    %267 = vmatprep.subr.mxu0 0.0
    %268 = vmatpush1.msra.mxu0 %v241
    %269 = vmatprep.subr.mxu0 0.0
    %270 = vmatpush1.msra.mxu0 %v240
    %271 = vmatprep.subr.mxu0 0.0
    %272 = vmatpush1.msra.mxu0 %v239
    %273 = vmatprep.subr.mxu0 0.0
    %274 = vmatpush1.msra.mxu0 %v238
    %275 = vmatprep.subr.mxu0 0.0
    %276 = vmatpush1.msra.mxu0 %v237
    %277 = vmatprep.subr.mxu0 0.0
    %278 = vmatpush1.msra.mxu0 %v236
    %279 = vmatprep.subr.mxu0 0.0
    %280 = vmatpush1.msra.mxu0 %v235
    %281 = vmatprep.subr.mxu0 0.0
    %282 = vmatpush2.msra.mxu0 0.0
    %283 = vmatprep.subr.mxu0 0.0
    %284 = vmatpush2.msra.mxu0 0.0
    %285 = vmatprep.subr.mxu0 0.0
    %286 = vmatpush2.msra.mxu0 0.0
    %287 = vmatprep.subr.mxu0 0.0
    %288 = vmatpush2.msra.mxu0 0.0
    %289 = vmatprep.subr.mxu0 0.0
    %290 = vmatpush2.msra.mxu0 0.0
    %291 = vmatprep.subr.mxu0 0.0
    %292 = vmatpush2.msra.mxu0 0.0
    %293 = vmatprep.subr.mxu0 0.0
    %294 = vmatpush2.msra.mxu0 0.0
    %295 = vmatprep.subr.mxu0 0.0
    %296 = vmatpush2.msra.mxu0 0.0
    %297 = vmatprep.subr.mxu0 0.0
    %298 = vmatpush2.msra.mxu0 0.0
    %299 = vmatprep.subr.mxu0 0.0
    %300 = vmatpush2.msra.mxu0 0.0
    %301 = vmatprep.subr.mxu0 0.0
    %302 = vmatpush2.msra.mxu0 0.0
    %303 = vmatprep.subr.mxu0 0.0
    %304 = vmatpush2.msra.mxu0 0.0
    %305 = vmatprep.subr.mxu0 0.0
    %306 = vmatpush2.msra.mxu0 0.0
    %307 = vmatprep.subr.mxu0 0.0
    %308 = vmatpush2.msra.mxu0 0.0
    %309 = vmatprep.subr.mxu0 0.0
    %310 = vmatpush2.msra.mxu0 0.0
    %311 = vmatprep.subr.mxu0 0.0
    %312 = vmatpush2.msra.mxu0 0.0
    %313 = vmatprep.mubr.f32.mxu0 0.0
    %314 = vmatmul.mubr.f32.gmra.mxu0 %v244
    %v315 = vpop.f32.mrf.mxu0
    %v316 = vadd.f32 0.0, %v315
    %v317 = vpop.f32.mrf.mxu0
    %318 = vmatprep.mubr.f32.mxu0 0.0
    %319 = vmatmul.mubr.f32.gmra.mxu0 %v247
    %v320 = vpop.f32.mrf.mxu0
    %v321 = vadd.f32 0.0, %v320
    %v322 = vpop.f32.mrf.mxu0
    %323 = vdwg.mxu0
    %v324 = vmul.f32 %v31, %v232
    %v325 = vmul.f32 %v32, %v234
    %v327 = vsel %vm66, %v324, 0
    %v330 = vsel %vm66, %v325, 0
    %332 = vmatprep.subr.mxu0 0.0
    %333 = vmatpush1.msra.mxu0 0.0
    %334 = vmatprep.subr.mxu0 0.0
    %335 = vmatpush1.msra.mxu0 0.0
    %336 = vmatprep.subr.mxu0 0.0
    %337 = vmatpush1.msra.mxu0 0.0
    %338 = vmatprep.subr.mxu0 0.0
    %339 = vmatpush1.msra.mxu0 0.0
    %340 = vmatprep.subr.mxu0 0.0
    %341 = vmatpush1.msra.mxu0 0.0
    %342 = vmatprep.subr.mxu0 0.0
    %343 = vmatpush1.msra.mxu0 0.0
    %344 = vmatprep.subr.mxu0 0.0
    %345 = vmatpush1.msra.mxu0 0.0
    %346 = vmatprep.subr.mxu0 0.0
    %347 = vmatpush1.msra.mxu0 0.0
    %348 = vmatprep.subr.mxu0 0.0
    %349 = vmatpush1.msra.mxu0 %v242
    %350 = vmatprep.subr.mxu0 0.0
    %351 = vmatpush1.msra.mxu0 %v241
    %352 = vmatprep.subr.mxu0 0.0
    %353 = vmatpush1.msra.mxu0 %v240
    %354 = vmatprep.subr.mxu0 0.0
    %355 = vmatpush1.msra.mxu0 %v239
    %356 = vmatprep.subr.mxu0 0.0
    %357 = vmatpush1.msra.mxu0 %v238
    %358 = vmatprep.subr.mxu0 0.0
    %359 = vmatpush1.msra.mxu0 %v237
    %360 = vmatprep.subr.mxu0 0.0
    %361 = vmatpush1.msra.mxu0 %v236
    %362 = vmatprep.subr.mxu0 0.0
    %363 = vmatpush1.msra.mxu0 %v235
    %364 = vmatprep.subr.mxu0 0.0
    %365 = vmatpush2.msra.mxu0 0.0
    %366 = vmatprep.subr.mxu0 0.0
    %367 = vmatpush2.msra.mxu0 0.0
    %368 = vmatprep.subr.mxu0 0.0
    %369 = vmatpush2.msra.mxu0 0.0
    %370 = vmatprep.subr.mxu0 0.0
    %371 = vmatpush2.msra.mxu0 0.0
    %372 = vmatprep.subr.mxu0 0.0
    %373 = vmatpush2.msra.mxu0 0.0
    %374 = vmatprep.subr.mxu0 0.0
    %375 = vmatpush2.msra.mxu0 0.0
    %376 = vmatprep.subr.mxu0 0.0
    %377 = vmatpush2.msra.mxu0 0.0
    %378 = vmatprep.subr.mxu0 0.0
    %379 = vmatpush2.msra.mxu0 0.0
    %380 = vmatprep.subr.mxu0 0.0
    %381 = vmatpush2.msra.mxu0 0.0
    %382 = vmatprep.subr.mxu0 0.0
    %383 = vmatpush2.msra.mxu0 0.0
    %384 = vmatprep.subr.mxu0 0.0
    %385 = vmatpush2.msra.mxu0 0.0
    %386 = vmatprep.subr.mxu0 0.0
    %387 = vmatpush2.msra.mxu0 0.0
    %388 = vmatprep.subr.mxu0 0.0
    %389 = vmatpush2.msra.mxu0 0.0
    %390 = vmatprep.subr.mxu0 0.0
    %391 = vmatpush2.msra.mxu0 0.0
    %392 = vmatprep.subr.mxu0 0.0
    %393 = vmatpush2.msra.mxu0 0.0
    %394 = vmatprep.subr.mxu0 0.0
    %395 = vmatpush2.msra.mxu0 0.0
    %396 = vmatprep.mubr.f32.mxu0 0.0
    %397 = vmatmul.mubr.f32.gmra.mxu0 %v327
    %v398 = vpop.f32.mrf.mxu0
    %v399 = vadd.f32 0.0, %v398
    %v400 = vpop.f32.mrf.mxu0
    %401 = vmatprep.mubr.f32.mxu0 0.0
    %402 = vmatmul.mubr.f32.gmra.mxu0 %v330
    %v403 = vpop.f32.mrf.mxu0
    %v404 = vadd.f32 0.0, %v403
    %v405 = vpop.f32.mrf.mxu0
    %406 = vdwg.mxu0
    %v407 = vrcp.pop %v316
    %v408 = vrcp.pop %v321
    %v409 = vmul.f32 %v399, %v407
    %v410 = vmul.f32 %v404, %v408
    %v411 = vld [vmem:[%s4] sm:$0xff]
    %v412 = vld [vmem:[%s4 + $0x8] sm:$0xff]
    %v413 = vld [vmem:[%s5] sm:$0x1]
    %v415 = vlaneseq
    %v416 = vshrl.u32 %v415, 7
    %v417 = vsub.s32 0, %v416
    %v418 = vrot.slane %v413, %v417
    %vm420 = vcmask 130048
    %v422 = vsel %vm420, %v409, 0
    %v425 = vsel %vm420, %v410, 0
    %427 = vmatprep.subr.mxu0 0.0
    %428 = vmatpush1.msra.mxu0 0.0
    %429 = vmatprep.subr.mxu0 0.0
    %430 = vmatpush1.msra.mxu0 0.0
    %431 = vmatprep.subr.mxu0 0.0
    %432 = vmatpush1.msra.mxu0 0.0
    %433 = vmatprep.subr.mxu0 0.0
    %434 = vmatpush1.msra.mxu0 0.0
    %435 = vmatprep.subr.mxu0 0.0
    %436 = vmatpush1.msra.mxu0 0.0
    %437 = vmatprep.subr.mxu0 0.0
    %438 = vmatpush1.msra.mxu0 0.0
    %439 = vmatprep.subr.mxu0 0.0
    %440 = vmatpush1.msra.mxu0 0.0
    %441 = vmatprep.subr.mxu0 0.0
    %442 = vmatpush1.msra.mxu0 0.0
    %443 = vmatprep.subr.mxu0 0.0
    %444 = vmatpush1.msra.mxu0 0.0
    %445 = vmatprep.subr.mxu0 0.0
    %446 = vmatpush1.msra.mxu0 0.0
    %447 = vmatprep.subr.mxu0 0.0
    %448 = vmatpush1.msra.mxu0 0.0
    %449 = vmatprep.subr.mxu0 0.0
    %450 = vmatpush1.msra.mxu0 0.0
    %451 = vmatprep.subr.mxu0 0.0
    %452 = vmatpush1.msra.mxu0 0.0
    %453 = vmatprep.subr.mxu0 0.0
    %454 = vmatpush1.msra.mxu0 0.0
    %455 = vmatprep.subr.mxu0 0.0
    %456 = vmatpush1.msra.mxu0 %v412
    %457 = vmatprep.subr.mxu0 0.0
    %458 = vmatpush1.msra.mxu0 %v411
    %459 = vmatprep.subr.mxu0 0.0
    %460 = vmatpush2.msra.mxu0 0.0
    %461 = vmatprep.subr.mxu0 0.0
    %462 = vmatpush2.msra.mxu0 0.0
    %463 = vmatprep.subr.mxu0 0.0
    %464 = vmatpush2.msra.mxu0 0.0
    %465 = vmatprep.subr.mxu0 0.0
    %466 = vmatpush2.msra.mxu0 0.0
    %467 = vmatprep.subr.mxu0 0.0
    %468 = vmatpush2.msra.mxu0 0.0
    %469 = vmatprep.subr.mxu0 0.0
    %470 = vmatpush2.msra.mxu0 0.0
    %471 = vmatprep.subr.mxu0 0.0
    %472 = vmatpush2.msra.mxu0 0.0
    %473 = vmatprep.subr.mxu0 0.0
    %474 = vmatpush2.msra.mxu0 0.0
    %475 = vmatprep.subr.mxu0 0.0
    %476 = vmatpush2.msra.mxu0 0.0
    %477 = vmatprep.subr.mxu0 0.0
    %478 = vmatpush2.msra.mxu0 0.0
    %479 = vmatprep.subr.mxu0 0.0
    %480 = vmatpush2.msra.mxu0 0.0
    %481 = vmatprep.subr.mxu0 0.0
    %482 = vmatpush2.msra.mxu0 0.0
    %483 = vmatprep.subr.mxu0 0.0
    %484 = vmatpush2.msra.mxu0 0.0
    %485 = vmatprep.subr.mxu0 0.0
    %486 = vmatpush2.msra.mxu0 0.0
    %487 = vmatprep.subr.mxu0 0.0
    %488 = vmatpush2.msra.mxu0 0.0
    %489 = vmatprep.subr.mxu0 0.0
    %490 = vmatpush2.msra.mxu0 0.0
    %491 = vmatprep.mubr.f32.mxu0 0.0
    %492 = vmatmul.mubr.f32.gmra.mxu0 %v422
    %v493 = vpop.f32.mrf.mxu0
    %v494 = vadd.f32 %v418, %v493
    %v495 = vpop.f32.mrf.mxu0
    %496 = vmatprep.mubr.f32.mxu0 0.0
    %497 = vmatmul.mubr.f32.gmra.mxu0 %v425
    %v498 = vpop.f32.mrf.mxu0
    %v499 = vadd.f32 %v418, %v498
    %v500 = vpop.f32.mrf.mxu0
    %501 = vdwg.mxu0
    %502 = vadd.xlane.f32.xlu0 %v494
    %v503 = vpop.xlane.xlu0 %502
    %504 = vadd.xlane.f32.xlu0 %v499
    %v505 = vpop.xlane.xlu0 %504
    %v506 = vmul.f32 %v503, 0.03125
    %v507 = vmul.f32 %v505, 0.03125
    %v508 = vmul.f32 %v494, %v494
    %v509 = vmul.f32 %v499, %v499
    %510 = vadd.xlane.f32.xlu0 %v508
    %v511 = vpop.xlane.xlu0 %510
    %512 = vadd.xlane.f32.xlu0 %v509
    %v513 = vpop.xlane.xlu0 %512
    %v514 = vmul.f32 %v511, 0.03125
    %v515 = vmul.f32 %v513, 0.03125
    %v516 = vmul.f32 %v506, %v506
    %v517 = vmul.f32 %v507, %v507
    %v518 = vsub.f32 %v514, %v516
    %v519 = vsub.f32 %v515, %v517
    %v520 = vsub.f32 %v494, %v506
    %v521 = vsub.f32 %v499, %v507
    %v522 = vadd.f32 %v518, 1e-05
    %v523 = vadd.f32 %v519, 1e-05
    %v524 = vrsqrt.pop %v522
    %v525 = vrsqrt.pop %v523
    %v526 = vmul.f32 %v520, %v524
    %v527 = vmul.f32 %v521, %v525
    %v528 = vld [vmem:[%s6] sm:$0x1]
    %v530 = vlaneseq
    %v531 = vshrl.u32 %v530, 7
    %v532 = vsub.s32 0, %v531
    %v533 = vrot.slane %v528, %v532
    %v535 = vmul.f32 %v526, %v533
    %v536 = vmul.f32 %v527, %v533
    %v537 = vld [vmem:[%s7] sm:$0x1]
    %v539 = vlaneseq
    %v540 = vshrl.u32 %v539, 7
    %v541 = vsub.s32 0, %v540
    %v542 = vrot.slane %v537, %v541
    %v544 = vadd.f32 %v535, %v542
    %v545 = vadd.f32 %v536, %v542
    %546 = vst [vmem:[#allocation2] sm:$0xff] %v544
    %547 = vst [vmem:[#allocation2 + $0x8] sm:$0xff] %v545
    // Predicated region
    $region34: #{tpu_custom_call.1} parent=1 // pred_check
      _
    $region35: #{tpu_custom_call.1} parent=1 // pred_check_branch
      %549 = sbr.rel (0) target = $region37
    $region36: #{tpu_custom_call.1} parent=1 // pred_region
      %s551 = ssub.s32 256, 256
      %552 = vsyncadd [#allocation3], %s551
      %s553 = sshll.u32 [#allocation2], 4
      %s554 = int_to_ptr.vmem [resolvable:$true] %s553
      %559 = dma.vmem_to_hbm [thread:$0]  %s554, 256, %s8, [#allocation3], 128, 128, 8
    $region37: #{tpu_custom_call.1} parent=1 // pred_fallthru
      _
    // Predicated region
    $region38: #{tpu_custom_call.1} parent=1 // pred_check
      _
    $region39: #{tpu_custom_call.1} parent=1 // pred_check_branch
      %561 = sbr.rel (0) target = $region41
    $region40: #{tpu_custom_call.1} parent=1 // pred_region
      %562 = dma.done [#allocation3], 256
    $region41: #{tpu_custom_call.1} parent=1 // pred_fallthru
      _
    %563 = vsyncpa [#allocation3], 1

</llo_original>
